<compile_context>
chip_gen: v7x
topology: tpu7x:2x2x1
jax: 0.10.0
libtpu: 0.0.40
codegen_flags: <defaults>
</compile_context>

<pallas_src>
import functools
import math

import jax
import jax.numpy as jnp
from jax.experimental import pallas as pl
from jax.experimental.pallas import tpu as pltpu


def _tensorcores_per_chip():
    """Best-effort detection of multi-TensorCore chips (v7x). Perf-only."""
    try:
        kind = jax.devices()[0].device_kind.lower()
        if "v7" in kind or "7x" in kind:
            return 2
    except Exception:
        pass
    return 1


def _vmem_capacity_bytes():
    try:
        return int(pltpu.get_tpu_info().vmem_capacity_bytes)
    except Exception:
        return 64 * 2**20  # conservative (v7x per-core VMEM)


def _attn_ca_kernel(q_ref, k_ref, w_ref, o_ref,
                    fold_ref, sumsq_ref, y_ref, *, n_chunk_reps, eps):
    """Grid = (head_group, batch, head-in-group, spatial-chunk).

    head & chunk are reduction axes into VMEM scratch; the output block
    (one f32 (c, l) partial per (group, batch)) is written once at the end.
    """
    hd = pl.program_id(2)
    ri = pl.program_id(3)
    last_h = pl.num_programs(2) - 1
    last_r = pl.num_programs(3) - 1

    L = fold_ref.shape[1]  # pooled KV length

    @pl.when(ri == 0)
    def _():
        fold_ref[...] = jnp.zeros_like(fold_ref)
        sumsq_ref[...] = jnp.zeros_like(sumsq_ref)

    @pl.when((hd == 0) & (ri == 0))
    def _():
        y_ref[...] = jnp.zeros_like(y_ref)

    # --- streaming phase: fold the rep_l periods of q and accumulate ||q||^2.
    # One input-dtype slice at a time; fold += s and sq += sum(s*s) fused so no
    # full-chunk f32 transient is ever stored and re-read.
    fold = fold_ref[...]
    ssq = sumsq_ref[...]
    for r in range(n_chunk_reps):  # static unroll, lane-aligned slices
        s = q_ref[:, r * L:(r + 1) * L].astype(jnp.float32)   # (cq, L)
        fold = fold + s
        ssq = ssq + jnp.sum(s * s, axis=-1, keepdims=True)    # XLU lane reduce
    fold_ref[...] = fold
    sumsq_ref[...] = ssq

    # --- per-head attention + fused project_out (runs once per head)
    @pl.when(ri == last_r)
    def _():
        # F.normalize(q, dim=-1): q / max(||q||, eps) == q * rsqrt(max(||q||^2, eps^2))
        q_scale = jax.lax.rsqrt(jnp.maximum(sumsq_ref[...], eps * eps))   # (cq, 1)
        qf = fold_ref[...] * q_scale                                      # (cq, L) f32

        kh = k_ref[...].astype(jnp.float32)    # (ck, L), pre-normalized in XLA (== v)

        # attn = softmax(q @ k^T) on the un-tiled k (rep_c cancels, rep_l folded into qf)
        a = jnp.einsum('ql,kl->qk', qf, kh,
                       preferred_element_type=jnp.float32)                # (cq, ck)
        a = a - jnp.max(a, axis=-1, keepdims=True)
        e = jnp.exp(a)
        p = e / jnp.sum(e, axis=-1, keepdims=True)                        # exact; tiny tensor

        # fused project_out, reassociated: (W_h @ attn) @ k ; epilogue matmuls kept
        # in f32 (FLOPs are negligible; avoids bf16 round-trips of the small tensors)
        m = jnp.dot(w_ref[...].astype(jnp.float32), p,
                    preferred_element_type=jnp.float32)                   # (c, ck)
        y_ref[...] += jnp.dot(m, kh, preferred_element_type=jnp.float32)  # (c, L)

    @pl.when((hd == last_h) & (ri == last_r))
    def _():
        o_ref[...] = y_ref[...].astype(o_ref.dtype)


def _tile_kernel(y_ref, o_ref, *, reps_per_block):
    # torch.repeat along the flattened spatial axis: write reps_per_block copies
    # of the compact (c, L) result per grid step, with lane-aligned static stores.
    L = y_ref.shape[-1]
    src = y_ref[...]
    for r in range(reps_per_block):
        o_ref[:, r * L:(r + 1) * L] = src


def attention_ca(Q, kv, w_proj, b_proj, *, num_heads, head_groups=None):
    b, c, h, w_sp = Q.shape
    _, ckv, l = kv.shape
    assert c % num_heads == 0
    assert ckv % (4 * num_heads) == 0
    cq = c // num_heads
    ck = (ckv // 4) // num_heads

    # repeat factors chosen at trace time, exactly as the PyTorch branch on h
    if h == 512:
        rep_l = 64
    elif h == 256:
        rep_l = 16
    elif h == 128:
        rep_l = 4      # (rep_c = 2 cancels analytically inside the kernel)
    else:
        rep_l = 1      # (rep_c = 4 cancels analytically inside the kernel)

    hw = h * w_sp
    assert l * rep_l == hw, "q @ k^T requires (pooled kv length * repeat_l) == h*w"

    dt = Q.dtype
    itemsize = jnp.dtype(dt).itemsize
    eps = 1e-12

    # --- v7x: split heads into 2 "parallel" groups when only one batch element
    # exists, so the second TensorCore has work.  Harmless (one extra small
    # partial) if forced on a single-TC chip.
    if head_groups is None:
        head_groups = 2 if (_tensorcores_per_chip() >= 2 and b == 1) else 1
    if head_groups < 1 or num_heads % head_groups != 0:
        head_groups = 1
    n_groups = head_groups
    hpg = num_heads // n_groups

    # --- avg_pool1d over channel groups of 4 + F.normalize(k, dim=-1), in f32,
    # done in XLA: the kernel streams a clean, pre-normalized (ck, l) KV tile and
    # its epilogue no longer materializes/reduces the f32 k per (batch, head).
    k_pool = kv.astype(jnp.float32).reshape(b, ckv // 4, 4, l).mean(axis=2)
    k_pool = k_pool.reshape(b, num_heads, ck, l)
    k_nrm = jnp.sqrt(jnp.sum(k_pool * k_pool, axis=-1, keepdims=True))
    k_r = (k_pool / jnp.maximum(k_nrm, eps)).astype(dt)
    k_r = k_r.reshape(b, n_groups, hpg, ck, l)

    q_r = Q.reshape(b, num_heads, cq, hw).reshape(b, n_groups, hpg, cq, hw)
    # per-head columns of the 1x1 project_out weight: (n_groups, hpg, c, cq)
    w3 = (w_proj.reshape(c, c).reshape(c, num_heads, cq).transpose(1, 0, 2)
          .reshape(n_groups, hpg, c, cq).astype(dt))

    # --- Q chunking along the rep_l fold axis: target multi-MiB input-dtype
    # blocks (per-step fixed overhead ~0.35us must stay small vs. DMA time).
    target_q_bytes = 8 * 2**20 if _vmem_capacity_bytes() >= 100 * 2**20 else 4 * 2**20
    chunk_reps = rep_l
    if rep_l > 1:
        per_rep = max(1, cq * l * itemsize)
        budget = max(1, target_q_bytes // per_rep)
        cr = 1
        while cr * 2 <= rep_l and cr * 2 <= budget:   # rep_l is a power of two
            cr *= 2
        chunk_reps = cr
    n_chunks = rep_l // chunk_reps
    chunk_hw = chunk_reps * l

    def nbytes(shape, dtype):
        return math.prod(shape) * jnp.dtype(dtype).itemsize

    # VMEM sizing from the actual blocks (no f32 q-chunk transient any more);
    # fixed slack covers fold-carry spills and compiler temporaries.
    vmem_main = (2 * nbytes((cq, chunk_hw), dt)            # double-buffered Q block
                 + 2 * nbytes((ck, l), dt)                 # double-buffered K block
                 + 2 * nbytes((c, cq), dt)                 # double-buffered W block
                 + 2 * nbytes((c, l), jnp.float32)         # output block (f32 partial)
                 + nbytes((cq, l), jnp.float32)            # fold scratch
                 + nbytes((max(8, cq), 128), jnp.float32)  # sumsq scratch (padded)
                 + nbytes((c, l), jnp.float32)             # project_out accumulator
                 + 8 * 2**20)
    vmem_main = min(max(vmem_main, 16 * 2**20), 96 * 2**20)

    kernel = functools.partial(_attn_ca_kernel, n_chunk_reps=chunk_reps, eps=eps)
    y_part = pl.pallas_call(
        kernel,
        out_shape=jax.ShapeDtypeStruct((n_groups, b, c, l), jnp.float32),
        grid_spec=pltpu.PrefetchScalarGridSpec(
            num_scalar_prefetch=0,
            grid=(n_groups, b, hpg, n_chunks),
            in_specs=[
                pl.BlockSpec((None, None, None, cq, chunk_hw),
                             lambda gi, bi, hi, ri: (bi, gi, hi, 0, ri)),
                pl.BlockSpec((None, None, None, ck, l),
                             lambda gi, bi, hi, ri: (bi, gi, hi, 0, 0)),
                pl.BlockSpec((None, None, c, cq),
                             lambda gi, bi, hi, ri: (gi, hi, 0, 0)),
            ],
            out_specs=pl.BlockSpec((None, None, c, l),
                                   lambda gi, bi, hi, ri: (gi, bi, 0, 0)),
            scratch_shapes=[
                pltpu.VMEM((cq, l), jnp.float32),   # rep_l-folded q
                pltpu.VMEM((cq, 1), jnp.float32),   # ||q||^2 accumulator
                pltpu.VMEM((c, l), jnp.float32),    # fused project_out accumulator
            ],
        ),
        compiler_params=pltpu.CompilerParams(
            dimension_semantics=("parallel", "parallel", "arbitrary", "arbitrary"),
            vmem_limit_bytes=int(vmem_main),
        ),
    )(q_r, k_r, w3)

    # group-sum + bias on the compact (b, c, l) result (tiny vs. the tiled output)
    y_compact = (jnp.sum(y_part, axis=0)
                 + b_proj.reshape(1, c, 1).astype(jnp.float32)).astype(dt)

    if rep_l == 1:
        out_flat = y_compact
    else:
        # torch.repeat along the flattened spatial axis, R copies per grid step.
        reps_per_block = min(rep_l, 8)
        while reps_per_block > 1 and c * reps_per_block * l * itemsize > 8 * 2**20:
            reps_per_block //= 2
        n_tiles = rep_l // reps_per_block

        vmem_tile = (2 * nbytes((c, l), dt)
                     + 2 * nbytes((c, reps_per_block * l), dt)
                     + 4 * 2**20)
        vmem_tile = min(max(vmem_tile, 16 * 2**20), 96 * 2**20)

        out_flat = pl.pallas_call(
            functools.partial(_tile_kernel, reps_per_block=reps_per_block),
            out_shape=jax.ShapeDtypeStruct((b, c, hw), dt),
            grid_spec=pltpu.PrefetchScalarGridSpec(
                num_scalar_prefetch=0,
                grid=(b, n_tiles),
                # input block index is (bi, 0, 0) for every tile step: Pallas keeps
                # it resident and does not re-DMA it across ti.
                in_specs=[pl.BlockSpec((None, c, l), lambda bi, ti: (bi, 0, 0))],
                out_specs=pl.BlockSpec((None, c, reps_per_block * l),
                                       lambda bi, ti: (bi, 0, ti)),
            ),
            compiler_params=pltpu.CompilerParams(
                dimension_semantics=("parallel", "parallel"),
                vmem_limit_bytes=int(vmem_tile),
            ),
        )(y_compact)

    return out_flat.reshape(b, c, h, w_sp)


def attention_ca_ref(Q, kv, w_proj, b_proj, *, num_heads):
    """Plain-JAX mirror of the PyTorch forward, for numerical validation."""
    b, c, h, w_sp = Q.shape
    _, ckv, l = kv.shape
    x_pool = kv.reshape(b, ckv // 4, 4, l).mean(axis=2)     # avg_pool1d over channels
    cq = c // num_heads
    ck = (ckv // 4) // num_heads
    q = Q.reshape(b, num_heads, cq, h * w_sp)
    k = x_pool.reshape(b, num_heads, ck, l)
    v = k

    def l2norm(x):
        return x / jnp.maximum(jnp.linalg.norm(x, axis=-1, keepdims=True), 1e-12)

    q, k, v = l2norm(q), l2norm(k), l2norm(v)
    if h == 512:
        reps = (1, 1, 1, 64)
    elif h == 256:
        reps = (1, 1, 1, 16)
    elif h == 128:
        reps = (1, 1, 2, 4)
    else:
        reps = (1, 1, 4, 1)
    k = jnp.tile(k, reps)
    v = jnp.tile(v, reps)
    attn = jnp.einsum('bhcx,bhdx->bhcd', q, k)
    attn = jax.nn.softmax(attn, axis=-1)
    out = jnp.einsum('bhcd,bhdx->bhcx', attn, v)
    out = out.reshape(b, c, h, w_sp)
    out = jnp.einsum('oi,bixy->boxy', w_proj.reshape(c, c), out) \
        + b_proj.reshape(1, c, 1, 1)
    return out


if __name__ == "__main__":
    def run_case(case_key, batch, dim, num_heads, h, w_sp, ckv, l, head_groups=None):
        k1, k2, k3, k4 = jax.random.split(case_key, 4)
        Q = jax.random.normal(k1, (batch, dim, h, w_sp), jnp.float32)
        kv = jax.random.normal(k2, (batch, ckv, l), jnp.float32)
        # deterministic parameter init for project_out (Conv2d(dim, dim, 1), bias=True)
        w_proj = 0.02 * jax.random.normal(k3, (dim, dim, 1, 1), jnp.float32)
        b_proj = 0.01 * jax.random.normal(k4, (dim,), jnp.float32)

        out = attention_ca(Q, kv, w_proj, b_proj,
                           num_heads=num_heads, head_groups=head_groups)
        out = jax.block_until_ready(out)
        ref = attention_ca_ref(Q, kv, w_proj, b_proj, num_heads=num_heads)
        assert out.shape == (batch, dim, h, w_sp)
        err = jnp.max(jnp.abs(out - ref))
        assert jnp.allclose(out, ref, atol=1e-4, rtol=1e-4), f"mismatch, max abs err={err}"

    key = jax.random.PRNGKey(0)
    k_a, k_b, k_c = jax.random.split(key, 3)
    # small 'else' branch (rep_c=4, rep_l=1): pooled kv length == h*w
    run_case(k_a, batch=2, dim=16, num_heads=2, h=8, w_sp=8, ckv=16, l=64)
    # h == 128 branch (rep_c=2, rep_l=4): rep_l fold + R-wide tile-writeback kernel
    run_case(k_b, batch=1, dim=8, num_heads=2, h=128, w_sp=128, ckv=16, l=4096)
    # force the v7x-style 2-way head split so that code path is validated on any chip
    run_case(k_b, batch=1, dim=8, num_heads=2, h=128, w_sp=128, ckv=16, l=4096,
             head_groups=2)
    run_case(k_c, batch=1, dim=16, num_heads=4, h=8, w_sp=8, ckv=32, l=64,
             head_groups=2)

    print("KERNEL_OK")
</pallas_src>

<mosaic_0001>
module attributes {stable_mosaic.version = 11 : i64} {
  func.func @_attn_ca_kernel(%arg0: i32, %arg1: i32, %arg2: i32, %arg3: i32, %arg4: memref<1x1x1x8x64xf32, #tpu.memory_space<vmem>>, %arg5: memref<1x1x1x2x64xf32, #tpu.memory_space<vmem>>, %arg6: memref<1x1x16x8xf32, #tpu.memory_space<vmem>>, %arg7: memref<1x1x16x64xf32, #tpu.memory_space<vmem>>, %arg8: memref<8x64xf32, #tpu.memory_space<vmem>>, %arg9: memref<8x1xf32, #tpu.memory_space<vmem>>, %arg10: memref<16x64xf32, #tpu.memory_space<vmem>>) attributes {dimension_semantics = [#tpu.dimension_semantics<parallel>, #tpu.dimension_semantics<parallel>, #tpu.dimension_semantics<arbitrary>, #tpu.dimension_semantics<arbitrary>], iteration_bounds = array<i64: 1, 2, 2, 1>, scalar_prefetch = 0 : i64, scratch_operands = 3 : i64, tpu.core_type = #tpu.core_type<tc>, window_params = [{transform_indices = @transform_0, window_bounds = array<i64: 1, 1, 1, 8, 64>}, {transform_indices = @transform_1, window_bounds = array<i64: 1, 1, 1, 2, 64>}, {transform_indices = @transform_2, window_bounds = array<i64: 1, 1, 16, 8>}, {transform_indices = @transform_3, window_bounds = array<i64: 1, 1, 16, 64>}]} {
    %c0_i32 = arith.constant 0 : i32
    %0 = arith.cmpi eq, %arg3, %c0_i32 : i32
    %1 = arith.extui %0 : i1 to i32
    %c0_i32_0 = arith.constant 0 : i32
    %2 = arith.cmpi ne, %1, %c0_i32_0 : i32
    scf.if %2 {
      %cst_20 = arith.constant 0.000000e+00 : f32
      %27 = vector.broadcast %cst_20 : f32 to vector<8x64xf32>
      %c0_21 = arith.constant 0 : index
      %c0_22 = arith.constant 0 : index
      %28 = vector.load %arg8[%c0_21, %c0_22] : memref<8x64xf32, #tpu.memory_space<vmem>>, vector<8x64xf32>
      tpu.vector_store %arg8[%c0_21, %c0_22], %27 {strides = array<i32>} : memref<8x64xf32, #tpu.memory_space<vmem>>, vector<8x64xf32>,
      %cst_23 = arith.constant 0.000000e+00 : f32
      %29 = vector.broadcast %cst_23 : f32 to vector<8x1xf32>
      %c0_24 = arith.constant 0 : index
      %c0_25 = arith.constant 0 : index
      %30 = vector.load %arg9[%c0_24, %c0_25] : memref<8x1xf32, #tpu.memory_space<vmem>>, vector<8x1xf32>
      tpu.vector_store %arg9[%c0_24, %c0_25], %29 {strides = array<i32>} : memref<8x1xf32, #tpu.memory_space<vmem>>, vector<8x1xf32>,
    } else {
    }
    %c0_i32_1 = arith.constant 0 : i32
    %3 = arith.cmpi eq, %arg2, %c0_i32_1 : i32
    %c0_i32_2 = arith.constant 0 : i32
    %4 = arith.cmpi eq, %arg3, %c0_i32_2 : i32
    %5 = arith.andi %3, %4 : i1
    %6 = arith.extui %5 : i1 to i32
    %c0_i32_3 = arith.constant 0 : i32
    %7 = arith.cmpi ne, %6, %c0_i32_3 : i32
    scf.if %7 {
      %cst_20 = arith.constant 0.000000e+00 : f32
      %27 = vector.broadcast %cst_20 : f32 to vector<16x64xf32>
      %c0_21 = arith.constant 0 : index
      %c0_22 = arith.constant 0 : index
      %28 = vector.load %arg10[%c0_21, %c0_22] : memref<16x64xf32, #tpu.memory_space<vmem>>, vector<16x64xf32>
      tpu.vector_store %arg10[%c0_21, %c0_22], %27 {strides = array<i32>} : memref<16x64xf32, #tpu.memory_space<vmem>>, vector<16x64xf32>,
    } else {
    }
    %c0 = arith.constant 0 : index
    %c0_4 = arith.constant 0 : index
    %8 = vector.load %arg8[%c0, %c0_4] : memref<8x64xf32, #tpu.memory_space<vmem>>, vector<8x64xf32>
    %c0_5 = arith.constant 0 : index
    %c0_6 = arith.constant 0 : index
    %9 = vector.load %arg9[%c0_5, %c0_6] : memref<8x1xf32, #tpu.memory_space<vmem>>, vector<8x1xf32>
    %c0_7 = arith.constant 0 : index
    %c0_8 = arith.constant 0 : index
    %c0_9 = arith.constant 0 : index
    %c0_10 = arith.constant 0 : index
    %c0_11 = arith.constant 0 : index
    %10 = vector.load %arg4[%c0_7, %c0_8, %c0_9, %c0_10, %c0_11] : memref<1x1x1x8x64xf32, #tpu.memory_space<vmem>>, vector<1x1x1x8x64xf32>
    %11 = vector.shape_cast %10 : vector<1x1x1x8x64xf32> to vector<8x64xf32>
    %12 = arith.addf %8, %11 : vector<8x64xf32>
    %13 = arith.mulf %11, %11 : vector<8x64xf32>
    %cst = arith.constant dense<0.000000e+00> : vector<8xf32>
    %14 = vector.multi_reduction <add>, %13, %cst [1] : vector<8x64xf32> to vector<8xf32>
    %15 = vector.shape_cast %14 : vector<8xf32> to vector<8x1xf32>
    %16 = arith.addf %9, %15 : vector<8x1xf32>
    %c0_12 = arith.constant 0 : index
    %c0_13 = arith.constant 0 : index
    %17 = vector.load %arg8[%c0_12, %c0_13] : memref<8x64xf32, #tpu.memory_space<vmem>>, vector<8x64xf32>
    tpu.vector_store %arg8[%c0_12, %c0_13], %12 {strides = array<i32>} : memref<8x64xf32, #tpu.memory_space<vmem>>, vector<8x64xf32>,
    %c0_14 = arith.constant 0 : index
    %c0_15 = arith.constant 0 : index
    %18 = vector.load %arg9[%c0_14, %c0_15] : memref<8x1xf32, #tpu.memory_space<vmem>>, vector<8x1xf32>
    tpu.vector_store %arg9[%c0_14, %c0_15], %16 {strides = array<i32>} : memref<8x1xf32, #tpu.memory_space<vmem>>, vector<8x1xf32>,
    %c0_i32_16 = arith.constant 0 : i32
    %19 = arith.cmpi eq, %arg3, %c0_i32_16 : i32
    %20 = arith.extui %19 : i1 to i32
    %c0_i32_17 = arith.constant 0 : i32
    %21 = arith.cmpi ne, %20, %c0_i32_17 : i32
    scf.if %21 {
      %c0_20 = arith.constant 0 : index
      %c0_21 = arith.constant 0 : index
      %27 = vector.load %arg9[%c0_20, %c0_21] : memref<8x1xf32, #tpu.memory_space<vmem>>, vector<8x1xf32>
      %cst_22 = arith.constant 1.000000e-24 : f32
      %28 = vector.broadcast %cst_22 : f32 to vector<8x1xf32>
      %29 = arith.maximumf %27, %28 : vector<8x1xf32>
      %30 = math.rsqrt %29 : vector<8x1xf32>
      %c0_23 = arith.constant 0 : index
      %c0_24 = arith.constant 0 : index
      %31 = vector.load %arg8[%c0_23, %c0_24] : memref<8x64xf32, #tpu.memory_space<vmem>>, vector<8x64xf32>
      %32 = vector.broadcast %30 : vector<8x1xf32> to vector<8x64xf32>
      %33 = arith.mulf %31, %32 : vector<8x64xf32>
      %c0_25 = arith.constant 0 : index
      %c0_26 = arith.constant 0 : index
      %c0_27 = arith.constant 0 : index
      %c0_28 = arith.constant 0 : index
      %c0_29 = arith.constant 0 : index
      %34 = vector.load %arg5[%c0_25, %c0_26, %c0_27, %c0_28, %c0_29] : memref<1x1x1x2x64xf32, #tpu.memory_space<vmem>>, vector<1x1x1x2x64xf32>
      %35 = vector.shape_cast %34 : vector<1x1x1x2x64xf32> to vector<2x64xf32>
      "tpu.trace_start"() <{level = 10 : i32, message = "ql,kl->qk"}> : () -> ()
      %cst_30 = arith.constant dense<0.000000e+00> : vector<8x2xf32>
      %36 = tpu.matmul %33, %35, %cst_30 {dimension_numbers = #tpu.dot_dimension_numbers<[1], [1], [0], [0], [0, 0, 1, 0], [], []>} : vector<8x64xf32>, vector<2x64xf32>, vector<8x2xf32> -> vector<8x2xf32>
      "tpu.trace_stop"() : () -> ()
      %cst_31 = arith.constant dense<0xFF800000> : vector<8xf32>
      %37 = vector.multi_reduction <maximumf>, %36, %cst_31 [1] : vector<8x2xf32> to vector<8xf32>
      %38 = vector.shape_cast %37 : vector<8xf32> to vector<8x1xf32>
      %39 = vector.broadcast %38 : vector<8x1xf32> to vector<8x2xf32>
      %40 = arith.subf %36, %39 : vector<8x2xf32>
      %41 = math.exp %40 : vector<8x2xf32>
      %cst_32 = arith.constant dense<0.000000e+00> : vector<8xf32>
      %42 = vector.multi_reduction <add>, %41, %cst_32 [1] : vector<8x2xf32> to vector<8xf32>
      %43 = vector.shape_cast %42 : vector<8xf32> to vector<8x1xf32>
      %44 = vector.broadcast %43 : vector<8x1xf32> to vector<8x2xf32>
      %45 = arith.divf %41, %44 : vector<8x2xf32>
      %c0_33 = arith.constant 0 : index
      %c0_34 = arith.constant 0 : index
      %c0_35 = arith.constant 0 : index
      %c0_36 = arith.constant 0 : index
      %46 = vector.load %arg6[%c0_33, %c0_34, %c0_35, %c0_36] : memref<1x1x16x8xf32, #tpu.memory_space<vmem>>, vector<1x1x16x8xf32>
      %47 = vector.shape_cast %46 : vector<1x1x16x8xf32> to vector<16x8xf32>
      %cst_37 = arith.constant dense<0.000000e+00> : vector<16x2xf32>
      %48 = tpu.matmul %47, %45, %cst_37 {dimension_numbers = #tpu.dot_dimension_numbers<[1], [0], [0], [1], [0, 0, 1, 1], [], []>} : vector<16x8xf32>, vector<8x2xf32>, vector<16x2xf32> -> vector<16x2xf32>
      %c0_38 = arith.constant 0 : index
      %c0_39 = arith.constant 0 : index
      %49 = vector.load %arg10[%c0_38, %c0_39] : memref<16x64xf32, #tpu.memory_space<vmem>>, vector<16x64xf32>
      %cst_40 = arith.constant dense<0.000000e+00> : vector<16x64xf32>
      %50 = tpu.matmul %48, %35, %cst_40 {dimension_numbers = #tpu.dot_dimension_numbers<[1], [0], [0], [1], [0, 0, 1, 1], [], []>} : vector<16x2xf32>, vector<2x64xf32>, vector<16x64xf32> -> vector<16x64xf32>
      %51 = arith.addf %49, %50 : vector<16x64xf32>
      %c0_41 = arith.constant 0 : index
      %c0_42 = arith.constant 0 : index
      %52 = vector.load %arg10[%c0_41, %c0_42] : memref<16x64xf32, #tpu.memory_space<vmem>>, vector<16x64xf32>
      tpu.vector_store %arg10[%c0_41, %c0_42], %51 {strides = array<i32>} : memref<16x64xf32, #tpu.memory_space<vmem>>, vector<16x64xf32>,
    } else {
    }
    %c1_i32 = arith.constant 1 : i32
    %22 = arith.cmpi eq, %arg2, %c1_i32 : i32
    %c0_i32_18 = arith.constant 0 : i32
    %23 = arith.cmpi eq, %arg3, %c0_i32_18 : i32
    %24 = arith.andi %22, %23 : i1
    %25 = arith.extui %24 : i1 to i32
    %c0_i32_19 = arith.constant 0 : i32
    %26 = arith.cmpi ne, %25, %c0_i32_19 : i32
    scf.if %26 {
      %c0_20 = arith.constant 0 : index
      %c0_21 = arith.constant 0 : index
      %27 = vector.load %arg10[%c0_20, %c0_21] : memref<16x64xf32, #tpu.memory_space<vmem>>, vector<16x64xf32>
      %c0_22 = arith.constant 0 : index
      %c0_23 = arith.constant 0 : index
      %c0_24 = arith.constant 0 : index
      %c0_25 = arith.constant 0 : index
      %28 = vector.load %arg7[%c0_22, %c0_23, %c0_24, %c0_25] : memref<1x1x16x64xf32, #tpu.memory_space<vmem>>, vector<1x1x16x64xf32>
      %29 = vector.shape_cast %28 : vector<1x1x16x64xf32> to vector<16x64xf32>
      %30 = vector.shape_cast %27 : vector<16x64xf32> to vector<1x1x16x64xf32>
      tpu.vector_store %arg7[%c0_22, %c0_23, %c0_24, %c0_25], %30 {strides = array<i32>} : memref<1x1x16x64xf32, #tpu.memory_space<vmem>>, vector<1x1x16x64xf32>,
    } else {
    }
    return
  }
  func.func @transform_0(%arg0: i32, %arg1: i32, %arg2: i32, %arg3: i32) -> (i32, i32, i32, i32, i32) {
    %c0_i32 = arith.constant 0 : i32
    %c0_i32_0 = arith.constant 0 : i32
    return %arg1, %arg0, %arg2, %c0_i32, %arg3 : i32, i32, i32, i32, i32
  }
  func.func @transform_1(%arg0: i32, %arg1: i32, %arg2: i32, %arg3: i32) -> (i32, i32, i32, i32, i32) {
    %c0_i32 = arith.constant 0 : i32
    %c0_i32_0 = arith.constant 0 : i32
    %c0_i32_1 = arith.constant 0 : i32
    return %arg1, %arg0, %arg2, %c0_i32, %c0_i32_0 : i32, i32, i32, i32, i32
  }
  func.func @transform_2(%arg0: i32, %arg1: i32, %arg2: i32, %arg3: i32) -> (i32, i32, i32, i32) {
    %c0_i32 = arith.constant 0 : i32
    %c0_i32_0 = arith.constant 0 : i32
    %c0_i32_1 = arith.constant 0 : i32
    return %arg0, %arg2, %c0_i32, %c0_i32_0 : i32, i32, i32, i32
  }
  func.func @transform_3(%arg0: i32, %arg1: i32, %arg2: i32, %arg3: i32) -> (i32, i32, i32, i32) {
    %c0_i32 = arith.constant 0 : i32
    %c0_i32_0 = arith.constant 0 : i32
    %c0_i32_1 = arith.constant 0 : i32
    return %arg0, %arg1, %c0_i32, %c0_i32_0 : i32, i32, i32, i32
  }
}

</mosaic_0001>

<llo_original>
// kernel: tpu_custom_call.1
$region0: #{tpu_custom_call.1}
  #allocation0 [shape = 'u32[]', space=smem, size = 0x4, offset = 0x4, fixed_abs, tag = 'smem constant byte address 0x4 - core index']
  #allocation1 [shape = 'u32[144,128]{1,0:T(1,128)}', space=vmem, size = 0x12000, scoped, tag = 'internal scratch']
  #allocation2 [shape = 'f32[8,64]{1,0:T(8,128)}', space=vmem, size = 0x1000, scoped, tag = 'scratch operand']
  #allocation3 [shape = 'f32[8,1]{1,0:T(8,128)}', space=vmem, size = 0x1000, scoped, tag = 'scratch operand']
  #allocation4 [shape = 'f32[16,64]{1,0:T(8,128)}', space=vmem, size = 0x2000, scoped, tag = 'scratch operand']
  %s0 = inlined_call_operand.vmem [shape: f32[2,1,2,8,64], index: 0, kind: input, shape index: {}]
  %s1 = inlined_call_operand.vmem [shape: f32[2,1,2,2,64], index: 1, kind: input, shape index: {}]
  %s2 = inlined_call_operand.vmem [shape: f32[1,2,16,8], index: 2, kind: input, shape index: {}]
  %s3 = inlined_call_operand.hbm [shape: f32[1,2,16,64], index: 3, kind: output, shape index: {}]
  %s4 = sld [smem:[#allocation0]]
  $region61: #{tpu_custom_call.1} parent=0
    _
  %s6 = ssub.s32 1, %s4
  %s7 = scalar_select 0, %s6, %s4
  $region1: #{tpu_custom_call.1} parent=0
    #allocation5 [shape = 'u8[16384]{0}', space=vmem, size = 0x4000, scoped, tag = 'output window, operand 0']
    #allocation6 [shape = 's32[2]{0}', space=sflag, size = 0x8, scoped, tag = 'scoped memory for tpu_custom_call.1']
    %8 = vsyncpa [#allocation6], 0
    %s9 = scalar_lea.sflag [#allocation6], 1
    %10 = vsyncpa %s9, 0
    loop: start=0, step=1, limit=6
    $region2: #{tpu_custom_call.1} parent=1 // loop_pre_header
      _
    $region3: #{tpu_custom_call.1} parent=1 // loop_header
      %s12 = sphi 0, %s16
      %p13 = scmp.ge.s32.totalorder %s12, 6
      %s19 = sphi 0, %s45
      %s20 = sphi 0, %s41
      %s21 = sphi 0, %s37
      %s22 = sphi 0, %s33
      %s23 = sphi 0, %s19
      %s24 = sphi 0, %s20
      %s25 = sphi 0, %s21
      %s26 = sphi 0, %s22
      %s27 = sphi 0, %s23
      %s28 = sphi 0, %s24
      %s29 = sphi 0, %s25
      %s30 = sphi 0, %s26
      %s54 = sphi 0, %s56
      %s57 = sphi 0, %s54
      %s58 = sphi 0, %s57
      %s74 = sphi 0, %s58
      %s84 = sphi 0, %s86
      %s87 = sphi 0, %s84
      %s88 = sphi 0, %s87
      %s104 = sphi 0, %s88
      %s112 = sphi 0, %s114
      %s115 = sphi 0, %s112
      %s116 = sphi 0, %s115
      %s132 = sphi 0, %s116
      %s140 = sphi 0, %s142
      %s143 = sphi 0, %s140
      %s144 = sphi 0, %s143
      %s160 = sphi 0, %s144
    $region4: #{tpu_custom_call.1} parent=1 // loop_header_branch
      %15 = sbr.rel (%p13) target = $region8
    $region5: #{tpu_custom_call.1} parent=1 // loop_body
      %s17 = ssub.s32 %s12, 1
      %s18 = ssub.s32 %s12, 2
      %s31 = sadd.s32 1, %s22
      %p32 = scmp.ge.s32.totalorder %s31, 1
      %s33 = scalar_select %p32, 0, %s31
      %s34 = sadd.s32 1, %s21
      %s35 = scalar_select %p32, %s34, %s21
      %p36 = scmp.ge.s32.totalorder %s35, 2
      %s37 = scalar_select %p36, 0, %s35
      %s38 = sadd.s32 1, %s20
      %s39 = scalar_select %p36, %s38, %s20
      %p40 = scmp.ge.s32.totalorder %s39, 2
      %s41 = scalar_select %p40, 0, %s39
      %s42 = sadd.s32 1, %s19
      %s43 = scalar_select %p40, %s42, %s19
      %p44 = scmp.ge.s32.totalorder %s43, 1
      %s45 = scalar_select %p44, 0, %s43
      %s46 = ssub.s32 %s20, %s41
      %s47 = ssub.s32 %s19, %s45
      %s48 = sor.u32 %s46, %s47
      %s49 = ssub.s32 %s21, %s37
      %s50 = sor.u32 %s48, %s49
      %s51 = ssub.s32 %s22, %s33
      %s52 = sor.u32 %s50, %s51
      %p53 = scmp.eq.s32.totalorder %s52, 0
      %s55 = sadd.s32 %s54, 1
      %s56 = scalar_select %p53, %s54, %s55
      %p59 = pneg %p53
      %p60 = scmp.eq.s32.totalorder %s12, 3
      %p61 = por %p59, %p60
      %p62 = scmp.ne.s32.totalorder %s54, %s57
      %p63 = scmp.eq.s32.totalorder %s12, 0
      %p64 = por %p62, %p63
      %p65 = scmp.ne.s32.totalorder %s54, %s57
      %p66 = scmp.eq.s32.totalorder %s17, 3
      %p67 = por %p65, %p66
      %p68 = scmp.ne.s32.totalorder %s57, %s58
      %p69 = scmp.eq.s32.totalorder %s17, 0
      %p70 = por %p68, %p69
      %p71 = scmp.ne.s32.totalorder %s57, %s58
      %p72 = scmp.eq.s32.totalorder %s18, 3
      %p73 = por %p71, %p72
      %p75 = scmp.ne.s32.totalorder %s58, %s74
      %p76 = scmp.eq.s32.totalorder %s18, 0
      %p77 = por %p75, %p76
      %s78 = ssub.s32 %s20, %s41
      %s79 = ssub.s32 %s19, %s45
      %s80 = sor.u32 %s78, %s79
      %s81 = ssub.s32 %s21, %s37
      %s82 = sor.u32 %s80, %s81
      %p83 = scmp.eq.s32.totalorder %s82, 0
      %s85 = sadd.s32 %s84, 1
      %s86 = scalar_select %p83, %s84, %s85
      %p89 = pneg %p83
      %p90 = scmp.eq.s32.totalorder %s12, 3
      %p91 = por %p89, %p90
      %p92 = scmp.ne.s32.totalorder %s84, %s87
      %p93 = scmp.eq.s32.totalorder %s12, 0
      %p94 = por %p92, %p93
      %p95 = scmp.ne.s32.totalorder %s84, %s87
      %p96 = scmp.eq.s32.totalorder %s17, 3
      %p97 = por %p95, %p96
      %p98 = scmp.ne.s32.totalorder %s87, %s88
      %p99 = scmp.eq.s32.totalorder %s17, 0
      %p100 = por %p98, %p99
      %p101 = scmp.ne.s32.totalorder %s87, %s88
      %p102 = scmp.eq.s32.totalorder %s18, 3
      %p103 = por %p101, %p102
      %p105 = scmp.ne.s32.totalorder %s88, %s104
      %p106 = scmp.eq.s32.totalorder %s18, 0
      %p107 = por %p105, %p106
      %s108 = ssub.s32 %s19, %s45
      %s109 = ssub.s32 %s21, %s37
      %s110 = sor.u32 %s108, %s109
      %p111 = scmp.eq.s32.totalorder %s110, 0
      %s113 = sadd.s32 %s112, 1
      %s114 = scalar_select %p111, %s112, %s113
      %p117 = pneg %p111
      %p118 = scmp.eq.s32.totalorder %s12, 3
      %p119 = por %p117, %p118
      %p120 = scmp.ne.s32.totalorder %s112, %s115
      %p121 = scmp.eq.s32.totalorder %s12, 0
      %p122 = por %p120, %p121
      %p123 = scmp.ne.s32.totalorder %s112, %s115
      %p124 = scmp.eq.s32.totalorder %s17, 3
      %p125 = por %p123, %p124
      %p126 = scmp.ne.s32.totalorder %s115, %s116
      %p127 = scmp.eq.s32.totalorder %s17, 0
      %p128 = por %p126, %p127
      %p129 = scmp.ne.s32.totalorder %s115, %s116
      %p130 = scmp.eq.s32.totalorder %s18, 3
      %p131 = por %p129, %p130
      %p133 = scmp.ne.s32.totalorder %s116, %s132
      %p134 = scmp.eq.s32.totalorder %s18, 0
      %p135 = por %p133, %p134
      %s136 = ssub.s32 %s19, %s45
      %s137 = ssub.s32 %s20, %s41
      %s138 = sor.u32 %s136, %s137
      %p139 = scmp.eq.s32.totalorder %s138, 0
      %s141 = sadd.s32 %s140, 1
      %s142 = scalar_select %p139, %s140, %s141
      %p145 = pneg %p139
      %p146 = scmp.eq.s32.totalorder %s12, 3
      %p147 = por %p145, %p146
      %p148 = scmp.ne.s32.totalorder %s140, %s143
      %p149 = scmp.eq.s32.totalorder %s12, 0
      %p150 = por %p148, %p149
      %p151 = scmp.ne.s32.totalorder %s140, %s143
      %p152 = scmp.eq.s32.totalorder %s17, 3
      %p153 = por %p151, %p152
      %p154 = scmp.ne.s32.totalorder %s143, %s144
      %p155 = scmp.eq.s32.totalorder %s17, 0
      %p156 = por %p154, %p155
      %p157 = scmp.ne.s32.totalorder %s143, %s144
      %p158 = scmp.eq.s32.totalorder %s18, 3
      %p159 = por %p157, %p158
      %p161 = scmp.ne.s32.totalorder %s144, %s160
      %p162 = scmp.eq.s32.totalorder %s18, 0
      %p163 = por %p161, %p162
      %p164 = scmp.le.s32.totalorder 1, %s12
      %p165 = scmp.lt.s32.totalorder %s12, 5
      %p166 = pnand %p164, %p165
      %p167 = pneg %p166
      // Predicated region
      $region9: #{tpu_custom_call.1} parent=5 // pred_check
        _
      $region10: #{tpu_custom_call.1} parent=5 // pred_check_branch
        %169 = sbr.rel (%p166) target = $region12
      $region11: #{tpu_custom_call.1} parent=5 // pred_region
        %s170 = ssub.s32 %s12, 1
      $region12: #{tpu_custom_call.1} parent=5 // pred_fallthru
        _
      %p171 = scmp.lt.s32.totalorder %s12, 4
      // Predicated region
      $region13: #{tpu_custom_call.1} parent=5 // pred_check
        %p172 = pneg %p171
      $region14: #{tpu_custom_call.1} parent=5 // pred_check_branch
        %174 = sbr.rel (%p172) target = $region16
      $region15: #{tpu_custom_call.1} parent=5 // pred_region
        // Predicated region
        $region17: #{tpu_custom_call.1} parent=15 // pred_check
          %p175 = pneg %p64
        $region18: #{tpu_custom_call.1} parent=15 // pred_check_branch
          %177 = sbr.rel (%p175) target = $region20
        $region19: #{tpu_custom_call.1} parent=15 // pred_region
          %p178 = scmp.lt.s32.totalorder %s20, 1
          %s179 = scalar_select %p178, %s20, 1
          %p180 = scmp.lt.s32.totalorder %s19, 0
          %s181 = scalar_select %p180, %s19, 0
          %p182 = scmp.lt.s32.totalorder %s21, 1
          %s183 = scalar_select %p182, %s21, 1
          %p184 = scmp.lt.s32.totalorder %s22, 0
          %s185 = scalar_select %p184, %s22, 0
          %s186 = sadd.s32 %s185, %s183
          %s187 = smul.addr %s181, 2
          %s188 = sadd.s32 %s186, %s187
          %s189 = smul.addr %s179, 2
          %s190 = sadd.s32 %s188, %s189
          %s191 = smul.addr %s190, 8
          %s192 = scalar_lea.vmem %s0, %s191
        $region20: #{tpu_custom_call.1} parent=15 // pred_fallthru
          _
        // Predicated region
        $region21: #{tpu_custom_call.1} parent=15 // pred_check
          %p193 = pneg %p94
        $region22: #{tpu_custom_call.1} parent=15 // pred_check_branch
          %195 = sbr.rel (%p193) target = $region24
        $region23: #{tpu_custom_call.1} parent=15 // pred_region
          %p196 = scmp.lt.s32.totalorder %s20, 1
          %s197 = scalar_select %p196, %s20, 1
          %p198 = scmp.lt.s32.totalorder %s19, 0
          %s199 = scalar_select %p198, %s19, 0
          %p200 = scmp.lt.s32.totalorder %s21, 1
          %s201 = scalar_select %p200, %s21, 1
          %s202 = smul.addr %s199, 2
          %s203 = sadd.s32 %s201, %s202
          %s204 = smul.addr %s197, 2
          %s205 = sadd.s32 %s203, %s204
          %s206 = smul.addr %s205, 2
          %s207 = scalar_lea.vmem %s1, %s206
        $region24: #{tpu_custom_call.1} parent=15 // pred_fallthru
          _
        // Predicated region
        $region25: #{tpu_custom_call.1} parent=15 // pred_check
          %p208 = pneg %p122
        $region26: #{tpu_custom_call.1} parent=15 // pred_check_branch
          %210 = sbr.rel (%p208) target = $region28
        $region27: #{tpu_custom_call.1} parent=15 // pred_region
          %p211 = scmp.lt.s32.totalorder %s19, 0
          %s212 = scalar_select %p211, %s19, 0
          %p213 = scmp.lt.s32.totalorder %s21, 1
          %s214 = scalar_select %p213, %s21, 1
          %s215 = smul.addr %s214, 2
          %s216 = smul.addr %s212, 4
          %s217 = sadd.s32 %s215, %s216
          %s218 = smul.addr %s217, 8
          %s219 = scalar_lea.vmem %s2, %s218
        $region28: #{tpu_custom_call.1} parent=15 // pred_fallthru
          _
      $region16: #{tpu_custom_call.1} parent=5 // pred_fallthru
        _
      %p220 = scmp.le.s32.totalorder 1, %s12
      %p221 = scmp.lt.s32.totalorder %s12, 5
      %p222 = pnand %p220, %p221
      %p223 = pneg %p222
      // Predicated region
      $region29: #{tpu_custom_call.1} parent=5 // pred_check
        _
      $region30: #{tpu_custom_call.1} parent=5 // pred_check_branch
        %225 = sbr.rel (%p222) target = $region32
      $region31: #{tpu_custom_call.1} parent=5 // pred_region
        %s226 = ssub.s32 %s12, 1
        %p227 = scmp.lt.s32.totalorder %s24, 1
        %s228 = scalar_select %p227, %s24, 1
        %p229 = scmp.lt.s32.totalorder %s23, 0
        %s230 = scalar_select %p229, %s23, 0
        %p231 = scmp.lt.s32.totalorder %s25, 1
        %s232 = scalar_select %p231, %s25, 1
        %p233 = scmp.lt.s32.totalorder %s26, 0
        %s234 = scalar_select %p233, %s26, 0
        %s235 = sadd.s32 %s234, %s232
        %s236 = smul.addr %s230, 2
        %s237 = sadd.s32 %s235, %s236
        %s238 = smul.addr %s228, 2
        %s239 = sadd.s32 %s237, %s238
        %s240 = smul.addr %s239, 8
        %s241 = scalar_lea.vmem %s0, %s240
        %p242 = pneg %p70
        %p243 = pneg %p67
        %p244 = scmp.lt.s32.totalorder %s24, 1
        %s245 = scalar_select %p244, %s24, 1
        %p246 = scmp.lt.s32.totalorder %s23, 0
        %s247 = scalar_select %p246, %s23, 0
        %p248 = scmp.lt.s32.totalorder %s25, 1
        %s249 = scalar_select %p248, %s25, 1
        %s250 = smul.addr %s247, 2
        %s251 = sadd.s32 %s249, %s250
        %s252 = smul.addr %s245, 2
        %s253 = sadd.s32 %s251, %s252
        %s254 = smul.addr %s253, 2
        %s255 = scalar_lea.vmem %s1, %s254
        %p256 = pneg %p100
        %p257 = pneg %p97
        %p258 = scmp.lt.s32.totalorder %s23, 0
        %s259 = scalar_select %p258, %s23, 0
        %p260 = scmp.lt.s32.totalorder %s25, 1
        %s261 = scalar_select %p260, %s25, 1
        %s262 = smul.addr %s261, 2
        %s263 = smul.addr %s259, 4
        %s264 = sadd.s32 %s262, %s263
        %s265 = smul.addr %s264, 8
        %s266 = scalar_lea.vmem %s2, %s265
        %p267 = pneg %p128
        %p268 = pneg %p125
        %p269 = pneg %p156
        %p270 = pneg %p153
        %s271 = sand.u32 %s143, 1
        %s272 = scalar_lea.sflag [#allocation6], %s271
        %s273 = sand.u32 %s143, 1
        %s274 = smul.addr %s273, 16
        %s275 = scalar_lea.vmem [#allocation5], %s274
        %p276 = scmp.lt.s32.totalorder %s24, 1
        %s277 = scalar_select %p276, %s24, 1
        %p278 = scmp.lt.s32.totalorder %s23, 0
        %s279 = scalar_select %p278, %s23, 0
        %p280 = scmp.lt.s32.totalorder %s25, 1
        %s281 = scalar_select %p280, %s25, 1
        %p282 = scmp.lt.s32.totalorder %s26, 0
        %s283 = scalar_select %p282, %s26, 0
        %s284 = sadd.s32 %s283, %s281
        %s285 = smul.addr %s279, 2
        %s286 = sadd.s32 %s284, %s285
        %s287 = smul.addr %s277, 2
        %s288 = sadd.s32 %s286, %s287
        %s289 = smul.addr %s288, 8
        %s290 = scalar_lea.vmem %s0, %s289
        %p291 = scmp.lt.s32.totalorder %s24, 1
        %s292 = scalar_select %p291, %s24, 1
        %p293 = scmp.lt.s32.totalorder %s23, 0
        %s294 = scalar_select %p293, %s23, 0
        %p295 = scmp.lt.s32.totalorder %s25, 1
        %s296 = scalar_select %p295, %s25, 1
        %s297 = smul.addr %s294, 2
        %s298 = sadd.s32 %s296, %s297
        %s299 = smul.addr %s292, 2
        %s300 = sadd.s32 %s298, %s299
        %s301 = smul.addr %s300, 2
        %s302 = scalar_lea.vmem %s1, %s301
        %p303 = scmp.lt.s32.totalorder %s23, 0
        %s304 = scalar_select %p303, %s23, 0
        %p305 = scmp.lt.s32.totalorder %s25, 1
        %s306 = scalar_select %p305, %s25, 1
        %s307 = smul.addr %s306, 2
        %s308 = smul.addr %s304, 4
        %s309 = sadd.s32 %s307, %s308
        %s310 = smul.addr %s309, 8
        %s311 = scalar_lea.vmem %s2, %s310
        %p312 = scmp.eq.s32.totalorder %s26, 0
        // Predicated region
        $region33: #{tpu_custom_call.1} parent=31 // pred_check
          %p313 = pneg %p312
        $region34: #{tpu_custom_call.1} parent=31 // pred_check_branch
          %315 = sbr.rel (%p313) target = $region36
        $region35: #{tpu_custom_call.1} parent=31 // pred_region
          %vm316 = vcmask 523264
          %317 = vst.msk [vmem:[#allocation2] sm:$0xff] %vm316, 0.0
          %vm318 = vcmask 7168
          %319 = vst.msk [vmem:[#allocation3] sm:$0xff] %vm318, 0.0
        $region36: #{tpu_custom_call.1} parent=31 // pred_fallthru
          _
        %p320 = scmp.eq.s32.totalorder %s25, 0
        %p321 = pnand %p320, %p312
        %p322 = pneg %p321
        // Predicated region
        $region37: #{tpu_custom_call.1} parent=31 // pred_check
          _
        $region38: #{tpu_custom_call.1} parent=31 // pred_check_branch
          %324 = sbr.rel (%p321) target = $region40
        $region39: #{tpu_custom_call.1} parent=31 // pred_region
          %vm325 = vcmask 523264
          %326 = vst.msk [vmem:[#allocation4] sm:$0xff] %vm325, 0.0
          %327 = vst.msk [vmem:[#allocation4 + $0x8] sm:$0xff] %vm325, 0.0
        $region40: #{tpu_custom_call.1} parent=31 // pred_fallthru
          _
        %v328 = vld [vmem:[#allocation2] sm:$0xff]
        %v329 = vld [vmem:[#allocation3] sm:$0xff]
        %v330 = vld [vmem:[%s290] sm:$0xff]
        %v331 = vadd.f32 %v328, %v330
        %v332 = vmul.f32 %v330, %v330
        %vm333 = vcmask 523264
        %v334 = vsel %vm333, %v332, 0.0
        %335 = vadd.xlane.f32.xlu0 %v334
        %v336 = vpop.xlane.xlu0 %335
        %v337 = vadd.f32 %v329, %v336
        %338 = vst.msk [vmem:[#allocation2] sm:$0xff] %vm333, %v331
        %vm339 = vcmask 7168
        %340 = vst.msk [vmem:[#allocation3] sm:$0xff] %vm339, %v337
        // Predicated region
        $region41: #{tpu_custom_call.1} parent=31 // pred_check
          %p341 = pneg %p312
        $region42: #{tpu_custom_call.1} parent=31 // pred_check_branch
          %343 = sbr.rel (%p341) target = $region44
        $region43: #{tpu_custom_call.1} parent=31 // pred_region
          %v344 = vld [vmem:[#allocation3] sm:$0xff]
          %v345 = vmax.f32 %v344, 1e-24
          %v346 = vrsqrt.pop %v345
          %v347 = vld [vmem:[#allocation2] sm:$0xff]
          %349 = vset.pattern.permute.xlu0 0
          %350 = vperm.xlu0 %349, %v346
          %v351 = vpop.permute.xlu0 %350
          %v353 = vmul.f32 %v347, %v351
          %v354 = vld [vmem:[%s302] sm:$0x3]
          %v356 = vsel %vm333, %v353, 0
          %v359 = vsel %vm333, %v354, 0
          %361 = vmatprep.subr.mxu0 0.0
          %362 = vmatpush1.xpose.msra.mxu0 %v359
          %363 = vmatprep.subr.mxu0 0.0
          %364 = vmatpush1.xpose.msra.mxu0 0.0
          %365 = vmatprep.subr.mxu0 0.0
          %366 = vmatpush1.xpose.msra.mxu0 0.0
          %367 = vmatprep.subr.mxu0 0.0
          %368 = vmatpush1.xpose.msra.mxu0 0.0
          %369 = vmatprep.subr.mxu0 0.0
          %370 = vmatpush1.xpose.msra.mxu0 0.0
          %371 = vmatprep.subr.mxu0 0.0
          %372 = vmatpush1.xpose.msra.mxu0 0.0
          %373 = vmatprep.subr.mxu0 0.0
          %374 = vmatpush1.xpose.msra.mxu0 0.0
          %375 = vmatprep.subr.mxu0 0.0
          %376 = vmatpush1.xpose.msra.mxu0 0.0
          %377 = vmatprep.subr.mxu0 0.0
          %378 = vmatpush1.xpose.msra.mxu0 0.0
          %379 = vmatprep.subr.mxu0 0.0
          %380 = vmatpush1.xpose.msra.mxu0 0.0
          %381 = vmatprep.subr.mxu0 0.0
          %382 = vmatpush1.xpose.msra.mxu0 0.0
          %383 = vmatprep.subr.mxu0 0.0
          %384 = vmatpush1.xpose.msra.mxu0 0.0
          %385 = vmatprep.subr.mxu0 0.0
          %386 = vmatpush1.xpose.msra.mxu0 0.0
          %387 = vmatprep.subr.mxu0 0.0
          %388 = vmatpush1.xpose.msra.mxu0 0.0
          %389 = vmatprep.subr.mxu0 0.0
          %390 = vmatpush1.xpose.msra.mxu0 0.0
          %391 = vmatprep.subr.mxu0 0.0
          %392 = vmatpush1.xpose.msra.mxu0 0.0
          %393 = vmatprep.subr.mxu0 0.0
          %394 = vmatpush1.xpose.msra.mxu0 0.0
          %395 = vmatprep.subr.mxu0 0.0
          %396 = vmatpush1.xpose.msra.mxu0 0.0
          %397 = vmatprep.subr.mxu0 0.0
          %398 = vmatpush1.xpose.msra.mxu0 0.0
          %399 = vmatprep.subr.mxu0 0.0
          %400 = vmatpush1.xpose.msra.mxu0 0.0
          %401 = vmatprep.subr.mxu0 0.0
          %402 = vmatpush1.xpose.msra.mxu0 0.0
          %403 = vmatprep.subr.mxu0 0.0
          %404 = vmatpush1.xpose.msra.mxu0 0.0
          %405 = vmatprep.subr.mxu0 0.0
          %406 = vmatpush1.xpose.msra.mxu0 0.0
          %407 = vmatprep.subr.mxu0 0.0
          %408 = vmatpush1.xpose.msra.mxu0 0.0
          %409 = vmatprep.subr.mxu0 0.0
          %410 = vmatpush1.xpose.msra.mxu0 0.0
          %411 = vmatprep.subr.mxu0 0.0
          %412 = vmatpush1.xpose.msra.mxu0 0.0
          %413 = vmatprep.subr.mxu0 0.0
          %414 = vmatpush1.xpose.msra.mxu0 0.0
          %415 = vmatprep.subr.mxu0 0.0
          %416 = vmatpush1.xpose.msra.mxu0 0.0
          %417 = vmatprep.subr.mxu0 0.0
          %418 = vmatpush1.xpose.msra.mxu0 0.0
          %419 = vmatprep.subr.mxu0 0.0
          %420 = vmatpush1.xpose.msra.mxu0 0.0
          %421 = vmatprep.subr.mxu0 0.0
          %422 = vmatpush1.xpose.msra.mxu0 0.0
          %423 = vmatprep.subr.mxu0 0.0
          %424 = vmatpush1.xpose.msra.mxu0 0.0
          %425 = vmatprep.mubr.f32.mxu0 0.0
          %426 = vmatmul.mubr.f32.gmra.mrb[0].mxu0 %v356
          %v427 = vpop.f32.mrb[0].mxu0
          %v428 = vadd.f32 0.0, %v427
          %v429 = vpop.f32.mrb[0].mxu0
          %430 = vdwg.mxu0
          %vm431 = vcmask 15360
          %v432 = vsel %vm431, %v428, -inf
          %433 = vmax.xlane.f32.xlu0 %v432
          %v434 = vpop.xlane.xlu0 %433
          %v435 = vsub.f32 %v428, %v434
          %v436 = vmul.f32 %v435, 1.442695
          %v437 = vpow.pop %v436
          %v438 = vsel %vm431, %v437, 0.0
          %439 = vadd.xlane.f32.xlu0 %v438
          %v440 = vpop.xlane.xlu0 %439
          %v441 = vrcp.pop %v440
          %v442 = vmul.f32 %v437, %v441
          %v443 = vld [vmem:[%s311] sm:$0xff]
          %v444 = vld [vmem:[%s311 + $0x8] sm:$0xff]
          %vm445 = vcmask 64512
          %v447 = vsel %vm445, %v443, 0
          %v450 = vsel %vm445, %v444, 0
          %452 = vmatprep.subr.mxu0 0.0
          %453 = vmatpush1.msra.mxu0 %v442
          %454 = vmatprep.subr.mxu0 0.0
          %455 = vmatpush1.msra.mxu0 0.0
          %456 = vmatprep.subr.mxu0 0.0
          %457 = vmatpush1.msra.mxu0 0.0
          %458 = vmatprep.subr.mxu0 0.0
          %459 = vmatpush1.msra.mxu0 0.0
          %460 = vmatprep.subr.mxu0 0.0
          %461 = vmatpush1.msra.mxu0 0.0
          %462 = vmatprep.subr.mxu0 0.0
          %463 = vmatpush1.msra.mxu0 0.0
          %464 = vmatprep.subr.mxu0 0.0
          %465 = vmatpush1.msra.mxu0 0.0
          %466 = vmatprep.subr.mxu0 0.0
          %467 = vmatpush1.msra.mxu0 0.0
          %468 = vmatprep.subr.mxu0 0.0
          %469 = vmatpush1.msra.mxu0 0.0
          %470 = vmatprep.subr.mxu0 0.0
          %471 = vmatpush1.msra.mxu0 0.0
          %472 = vmatprep.subr.mxu0 0.0
          %473 = vmatpush1.msra.mxu0 0.0
          %474 = vmatprep.subr.mxu0 0.0
          %475 = vmatpush1.msra.mxu0 0.0
          %476 = vmatprep.subr.mxu0 0.0
          %477 = vmatpush1.msra.mxu0 0.0
          %478 = vmatprep.subr.mxu0 0.0
          %479 = vmatpush1.msra.mxu0 0.0
          %480 = vmatprep.subr.mxu0 0.0
          %481 = vmatpush1.msra.mxu0 0.0
          %482 = vmatprep.subr.mxu0 0.0
          %483 = vmatpush1.msra.mxu0 0.0
          %484 = vmatprep.subr.mxu0 0.0
          %485 = vmatpush1.msra.mxu0 0.0
          %486 = vmatprep.subr.mxu0 0.0
          %487 = vmatpush1.msra.mxu0 0.0
          %488 = vmatprep.subr.mxu0 0.0
          %489 = vmatpush1.msra.mxu0 0.0
          %490 = vmatprep.subr.mxu0 0.0
          %491 = vmatpush1.msra.mxu0 0.0
          %492 = vmatprep.subr.mxu0 0.0
          %493 = vmatpush1.msra.mxu0 0.0
          %494 = vmatprep.subr.mxu0 0.0
          %495 = vmatpush1.msra.mxu0 0.0
          %496 = vmatprep.subr.mxu0 0.0
          %497 = vmatpush1.msra.mxu0 0.0
          %498 = vmatprep.subr.mxu0 0.0
          %499 = vmatpush1.msra.mxu0 0.0
          %500 = vmatprep.subr.mxu0 0.0
          %501 = vmatpush1.msra.mxu0 0.0
          %502 = vmatprep.subr.mxu0 0.0
          %503 = vmatpush1.msra.mxu0 0.0
          %504 = vmatprep.subr.mxu0 0.0
          %505 = vmatpush1.msra.mxu0 0.0
          %506 = vmatprep.subr.mxu0 0.0
          %507 = vmatpush1.msra.mxu0 0.0
          %508 = vmatprep.subr.mxu0 0.0
          %509 = vmatpush1.msra.mxu0 0.0
          %510 = vmatprep.subr.mxu0 0.0
          %511 = vmatpush1.msra.mxu0 0.0
          %512 = vmatprep.subr.mxu0 0.0
          %513 = vmatpush1.msra.mxu0 0.0
          %514 = vmatprep.subr.mxu0 0.0
          %515 = vmatpush1.msra.mxu0 0.0
          %516 = vmatprep.mubr.f32.mxu0 0.0
          %517 = vmatmul.mubr.f32.gmra.mrb[0].mxu0 %v447
          %v518 = vpop.f32.mrb[0].mxu0
          %v519 = vadd.f32 0.0, %v518
          %v520 = vpop.f32.mrb[0].mxu0
          %521 = vmatprep.mubr.f32.mxu0 0.0
          %522 = vmatmul.mubr.f32.gmra.mrb[0].mxu0 %v450
          %v523 = vpop.f32.mrb[0].mxu0
          %v524 = vadd.f32 0.0, %v523
          %v525 = vpop.f32.mrb[0].mxu0
          %526 = vdwg.mxu0
          %v527 = vld [vmem:[#allocation4] sm:$0xff]
          %v528 = vld [vmem:[#allocation4 + $0x8] sm:$0xff]
          %v530 = vsel %vm431, %v519, 0
          %v533 = vsel %vm431, %v524, 0
          %vm535 = vcmask 1041408
          %v536 = vsel %vm535, %v354, 0
          %538 = vmatprep.subr.mxu0 0.0
          %539 = vmatpush1.msra.mxu0 %v536
          %540 = vmatprep.subr.mxu0 0.0
          %541 = vmatpush1.msra.mxu0 0.0
          %542 = vmatprep.subr.mxu0 0.0
          %543 = vmatpush1.msra.mxu0 0.0
          %544 = vmatprep.subr.mxu0 0.0
          %545 = vmatpush1.msra.mxu0 0.0
          %546 = vmatprep.subr.mxu0 0.0
          %547 = vmatpush1.msra.mxu0 0.0
          %548 = vmatprep.subr.mxu0 0.0
          %549 = vmatpush1.msra.mxu0 0.0
          %550 = vmatprep.subr.mxu0 0.0
          %551 = vmatpush1.msra.mxu0 0.0
          %552 = vmatprep.subr.mxu0 0.0
          %553 = vmatpush1.msra.mxu0 0.0
          %554 = vmatprep.subr.mxu0 0.0
          %555 = vmatpush1.msra.mxu0 0.0
          %556 = vmatprep.subr.mxu0 0.0
          %557 = vmatpush1.msra.mxu0 0.0
          %558 = vmatprep.subr.mxu0 0.0
          %559 = vmatpush1.msra.mxu0 0.0
          %560 = vmatprep.subr.mxu0 0.0
          %561 = vmatpush1.msra.mxu0 0.0
          %562 = vmatprep.subr.mxu0 0.0
          %563 = vmatpush1.msra.mxu0 0.0
          %564 = vmatprep.subr.mxu0 0.0
          %565 = vmatpush1.msra.mxu0 0.0
          %566 = vmatprep.subr.mxu0 0.0
          %567 = vmatpush1.msra.mxu0 0.0
          %568 = vmatprep.subr.mxu0 0.0
          %569 = vmatpush1.msra.mxu0 0.0
          %570 = vmatprep.subr.mxu0 0.0
          %571 = vmatpush1.msra.mxu0 0.0
          %572 = vmatprep.subr.mxu0 0.0
          %573 = vmatpush1.msra.mxu0 0.0
          %574 = vmatprep.subr.mxu0 0.0
          %575 = vmatpush1.msra.mxu0 0.0
          %576 = vmatprep.subr.mxu0 0.0
          %577 = vmatpush1.msra.mxu0 0.0
          %578 = vmatprep.subr.mxu0 0.0
          %579 = vmatpush1.msra.mxu0 0.0
          %580 = vmatprep.subr.mxu0 0.0
          %581 = vmatpush1.msra.mxu0 0.0
          %582 = vmatprep.subr.mxu0 0.0
          %583 = vmatpush1.msra.mxu0 0.0
          %584 = vmatprep.subr.mxu0 0.0
          %585 = vmatpush1.msra.mxu0 0.0
          %586 = vmatprep.subr.mxu0 0.0
          %587 = vmatpush1.msra.mxu0 0.0
          %588 = vmatprep.subr.mxu0 0.0
          %589 = vmatpush1.msra.mxu0 0.0
          %590 = vmatprep.subr.mxu0 0.0
          %591 = vmatpush1.msra.mxu0 0.0
          %592 = vmatprep.subr.mxu0 0.0
          %593 = vmatpush1.msra.mxu0 0.0
          %594 = vmatprep.subr.mxu0 0.0
          %595 = vmatpush1.msra.mxu0 0.0
          %596 = vmatprep.subr.mxu0 0.0
          %597 = vmatpush1.msra.mxu0 0.0
          %598 = vmatprep.subr.mxu0 0.0
          %599 = vmatpush1.msra.mxu0 0.0
          %600 = vmatprep.subr.mxu0 0.0
          %601 = vmatpush1.msra.mxu0 0.0
          %602 = vmatprep.mubr.f32.mxu0 0.0
          %603 = vmatmul.mubr.f32.gmra.mrb[0].mxu0 %v530
          %v604 = vpop.f32.mrb[0].mxu0
          %v605 = vadd.f32 0.0, %v604
          %v606 = vpop.f32.mrb[0].mxu0
          %607 = vmatprep.mubr.f32.mxu0 0.0
          %608 = vmatmul.mubr.f32.gmra.mrb[0].mxu0 %v533
          %v609 = vpop.f32.mrb[0].mxu0
          %v610 = vadd.f32 0.0, %v609
          %v611 = vpop.f32.mrb[0].mxu0
          %612 = vdwg.mxu0
          %v613 = vadd.f32 %v527, %v605
          %v614 = vadd.f32 %v528, %v610
          %615 = vst.msk [vmem:[#allocation4] sm:$0xff] %vm333, %v613
          %616 = vst.msk [vmem:[#allocation4 + $0x8] sm:$0xff] %vm333, %v614
        $region44: #{tpu_custom_call.1} parent=31 // pred_fallthru
          _
        %p617 = scmp.eq.s32.totalorder %s25, 1
        %p618 = pnand %p617, %p312
        %p619 = pneg %p618
        // Predicated region
        $region45: #{tpu_custom_call.1} parent=31 // pred_check
          _
        $region46: #{tpu_custom_call.1} parent=31 // pred_check_branch
          %621 = sbr.rel (%p618) target = $region48
        $region47: #{tpu_custom_call.1} parent=31 // pred_region
          %v622 = vld [vmem:[#allocation4] sm:$0xff]
          %v623 = vld [vmem:[#allocation4 + $0x8] sm:$0xff]
          %624 = vst.msk [vmem:[%s275] sm:$0xff] %vm333, %v622
          %625 = vst.msk [vmem:[%s275 + $0x8] sm:$0xff] %vm333, %v623
        $region48: #{tpu_custom_call.1} parent=31 // pred_fallthru
          _
        %s626 = sand.u32 %s143, 1
        %s627 = scalar_lea.sflag [#allocation6], %s626
        %s628 = sand.u32 %s143, 1
        %s629 = smul.addr %s628, 16
        %s630 = scalar_lea.vmem [#allocation5], %s629
        // Predicated region
        $region49: #{tpu_custom_call.1} parent=31 // pred_check
          %p631 = pneg %p153
        $region50: #{tpu_custom_call.1} parent=31 // pred_check_branch
          %633 = sbr.rel (%p631) target = $region52
        $region51: #{tpu_custom_call.1} parent=31 // pred_region
          %s635 = ssub.s32 256, 256
          %636 = vsyncadd %s627, %s635
          %s637 = smul.addr %s24, 2
          %s638 = smul.addr %s23, 4
          %s639 = sadd.s32 %s637, %s638
          %s640 = smul.addr %s639, 128
          %s641 = scalar_lea.hbm %s3, %s640
          %s642 = sshll.u32 %s630, 4
          %s643 = int_to_ptr.vmem [resolvable:$true] %s642
          %648 = dma.vmem_to_hbm [thread:$0]  %s643, 256, %s641, %s627, 128, 128, 8
        $region52: #{tpu_custom_call.1} parent=31 // pred_fallthru
          _
      $region32: #{tpu_custom_call.1} parent=5 // pred_fallthru
        _
      %p649 = scmp.le.s32.totalorder 2, %s12
      // Predicated region
      $region53: #{tpu_custom_call.1} parent=5 // pred_check
        %p650 = pneg %p649
      $region54: #{tpu_custom_call.1} parent=5 // pred_check_branch
        %652 = sbr.rel (%p650) target = $region56
      $region55: #{tpu_custom_call.1} parent=5 // pred_region
        %s653 = ssub.s32 %s12, 2
        // Predicated region
        $region57: #{tpu_custom_call.1} parent=55 // pred_check
          %p654 = pneg %p159
        $region58: #{tpu_custom_call.1} parent=55 // pred_check_branch
          %656 = sbr.rel (%p654) target = $region60
        $region59: #{tpu_custom_call.1} parent=55 // pred_region
          %s657 = sand.u32 %s144, 1
          %s658 = scalar_lea.sflag [#allocation6], %s657
          %s659 = sand.u32 %s144, 1
          %s660 = smul.addr %s659, 16
          %s661 = scalar_lea.vmem [#allocation5], %s660
          %662 = dma.done %s658, 256
        $region60: #{tpu_custom_call.1} parent=55 // pred_fallthru
          _
      $region56: #{tpu_custom_call.1} parent=5 // pred_fallthru
        _
    $region6: #{tpu_custom_call.1} parent=1 // loop_footer
      %s16 = sadd.s32 1, %s12
    $region7: #{tpu_custom_call.1} parent=1 // loop_footer_branch
      %11 = sbr.rel target = $region3
    $region8: #{tpu_custom_call.1} parent=1 // loop_exit
      _
    %663 = vsyncpa [#allocation6], 1
    %s664 = scalar_lea.sflag [#allocation6], 1
    %665 = vsyncpa %s664, 1

</llo_original>
